<compile_context>
chip_gen: v5e
topology: v5e:2x2
jax: 0.10.0
libtpu: 0.0.40
codegen_flags: <defaults>
</compile_context>

<pallas_src>
import jax
import jax.numpy as jnp
from jax.experimental import pallas as pl
from jax.experimental.pallas import tpu as pltpu


def mlp_kernel(x_ref, w1_ref, b1_ref, w2_ref, b2_ref, w3_ref, b3_ref, o_ref):
    # x arrives in its source dtype (f32); cast to bf16 on the VPU right before the MXU.
    x = x_ref[...].astype(jnp.bfloat16)                                   # (tb, in)

    # Layer 1: bf16 MXU, f32 accumulate; bias + ReLU epilogue in bf16 (h1 is needed in
    # bf16 for the layer-2 MXU pass anyway -> halves VALU work / vreg footprint).
    h1 = jnp.dot(x, w1_ref[...], preferred_element_type=jnp.float32)      # (tb, 64) f32
    h1 = jnp.maximum(h1.astype(jnp.bfloat16) + b1_ref[...], 0.0)          # (tb, 64) bf16

    # Layer 2: bf16 MXU, f32 epilogue (feeds the f32 output head).
    h2 = jnp.dot(h1, w2_ref[...], preferred_element_type=jnp.float32)     # (tb, 32) f32
    h2 = jnp.maximum(h2 + b2_ref[...], 0.0)                               # (tb, 32) f32

    # Layer 3 (out features == 1): contract the 32 features with the batch moved onto
    # the LANE axis, so the store is one dense (1, tb) row instead of a masked column.
    y = jnp.dot(w3_ref[...], h2.T, preferred_element_type=jnp.float32)    # (1, tb)
    o_ref[...] = (y + b3_ref[...]).reshape(o_ref.shape)                   # (1, 1, tb)


def _round_up(n, m):
    return ((n + m - 1) // m) * m


def _cdiv(a, b):
    return (a + b - 1) // b


def _choose_tb(batch, in_dim, requested=None):
    """Lane-aligned batch-tile selection (see perf notes at top of file)."""
    LANE = 128
    padded = _round_up(max(batch, 1), LANE)
    tb = _round_up(requested, LANE) if requested is not None else 2048
    # v5e guard: keep each f32 x tile <= ~4 MiB (x2 for double buffering) so we stay
    # inside the 16 MiB default scoped VMEM even for large in_dim.
    rows_cap = max(LANE, ((4 * 1024 * 1024) // max(4 * in_dim, 1)) // LANE * LANE)
    tb = max(LANE, min(tb, padded, rows_cap))
    # v7x: for big batches make sure there are >= 2 grid steps so both TensorCores
    # get work; for small batches a single big step wins (per-step overhead ~0.35us).
    if padded >= 2048 and tb >= padded:
        tb = max(LANE, _round_up(_cdiv(padded, 2), LANE))
    return tb


def simple_nn_forward(x, params, *, tb=None):
    """x: (batch, input_size) f32.  params from init_params.  Returns (batch, 1) f32."""
    w1, b1, w2, b2, w3, b3 = params
    batch, in_dim = x.shape

    tb = _choose_tb(batch, in_dim, tb)
    num_tiles = _cdiv(batch, tb)

    # bf16 operands for the MXU-heavy layers (tiny, one-time casts); the layer-3 head
    # and its bias stay f32.  x itself is NOT cast here -- the kernel does it.
    w1_bf = w1.astype(jnp.bfloat16)
    b1_bf = b1.astype(jnp.bfloat16)
    w2_bf = w2.astype(jnp.bfloat16)

    flops = 2 * batch * (in_dim * 64 + 64 * 32 + 32)
    bytes_accessed = int(
        batch * in_dim * x.dtype.itemsize            # x read (dominant term)
        + num_tiles * tb * 4                          # lane-dense f32 output write
        + w1_bf.size * 2 + w2_bf.size * 2
        + (b1.size + b2.size + w3.size + b3.size) * 4
    )

    # TODO(synk): if in_dim ever gets large enough that the x DMA is exposed, add
    # pipeline_mode=pl.Buffered(3) on the x BlockSpec.
    out = pl.pallas_call(
        mlp_kernel,
        out_shape=jax.ShapeDtypeStruct((num_tiles, 1, tb), jnp.float32),
        grid=(num_tiles,),
        in_specs=[
            # Activations: one f32 batch tile per grid step (auto double-buffered);
            # ragged last tile handled by the partial-block DMA.
            pl.BlockSpec((tb, in_dim), lambda i: (i, 0)),
            # Weights / biases: constant block index -> fetched once, VMEM-resident.
            pl.BlockSpec(w1_bf.shape, lambda i: (0, 0)),
            pl.BlockSpec(b1_bf.shape, lambda i: (0, 0)),
            pl.BlockSpec(w2_bf.shape, lambda i: (0, 0)),
            pl.BlockSpec(b2.shape, lambda i: (0, 0)),
            pl.BlockSpec(w3.shape, lambda i: (0, 0)),
            pl.BlockSpec(b3.shape, lambda i: (0, 0)),
        ],
        # Lane-dense output slab: each grid step writes one (1, 1, tb) row.
        out_specs=pl.BlockSpec((1, 1, tb), lambda i: (i, 0, 0)),
        compiler_params=pltpu.CompilerParams(
            dimension_semantics=("parallel",),
        ),
        cost_estimate=pl.CostEstimate(
            flops=flops, transcendentals=0, bytes_accessed=bytes_accessed),
    )(x, w1_bf, b1_bf, w2_bf, b2, w3, b3)

    # Lane-major slab -> (batch, 1) column; pure layout plumbing outside the kernel.
    return out.reshape(num_tiles * tb, 1)[:batch]


def init_params(key, input_size):
    # Mimics nn.Linear's U(-1/sqrt(fan_in), 1/sqrt(fan_in)) init.
    # w1/w2 stored as [in, out] so the kernel computes x @ W + b directly;
    # the final layer is stored as a row w3: (1, 32) and scalar bias b3: (1, 1).
    def linear_init(k, fan_in, fan_out):
        kw, kb = jax.random.split(k)
        bound = 1.0 / jnp.sqrt(fan_in)
        w = jax.random.uniform(kw, (fan_in, fan_out), jnp.float32, -bound, bound)
        b = jax.random.uniform(kb, (1, fan_out), jnp.float32, -bound, bound)
        return w, b

    k1, k2, k3 = jax.random.split(key, 3)
    w1, b1 = linear_init(k1, input_size, 64)
    w2, b2 = linear_init(k2, 64, 32)
    w3_col, b3 = linear_init(k3, 32, 1)
    w3 = w3_col.T  # (1, 32) row used by the lane-dense layer-3 path in the kernel
    return (w1, b1, w2, b2, w3, b3)


def reference_forward(x, params):
    # Pure-JAX reference using the same bf16-operand / f32-accumulate recipe as the kernel.
    w1, b1, w2, b2, w3, b3 = params
    xb = x.astype(jnp.bfloat16)
    h1 = jnp.dot(xb, w1.astype(jnp.bfloat16), preferred_element_type=jnp.float32)
    h1 = jnp.maximum(h1.astype(jnp.bfloat16) + b1.astype(jnp.bfloat16), 0.0)
    h2 = jnp.dot(h1, w2.astype(jnp.bfloat16), preferred_element_type=jnp.float32)
    h2 = jnp.maximum(h2 + b2, 0.0)
    return jnp.dot(h2, w3.T) + b3


if __name__ == "__main__":
    key = jax.random.PRNGKey(0)
    k_param, k_x1, k_x2 = jax.random.split(key, 3)

    batch, input_size = 100, 16
    params = init_params(k_param, input_size)
    x = jax.random.normal(k_x1, (batch, input_size), jnp.float32)

    # Single-step grid with a ragged 100-row tile inside a 128-row block.
    out = jax.block_until_ready(simple_nn_forward(x, params))
    ref = reference_forward(x, params)
    assert out.shape == (batch, 1)
    assert jnp.allclose(out, ref, atol=5e-3, rtol=5e-3)

    # Multi-step grid: 3 steps of 128 rows covering a ragged batch of 300.
    batch2 = 300
    x2 = jax.random.normal(k_x2, (batch2, input_size), jnp.float32)
    out2 = jax.block_until_ready(simple_nn_forward(x2, params, tb=128))
    ref2 = reference_forward(x2, params)
    assert out2.shape == (batch2, 1)
    assert jnp.allclose(out2, ref2, atol=5e-3, rtol=5e-3)

    print("KERNEL_OK")
</pallas_src>

<mosaic_0001>
module attributes {stable_mosaic.version = 11 : i64} {
  func.func @mlp_kernel(%arg0: i32, %arg1: memref<128x16xf32, #tpu.memory_space<vmem>>, %arg2: memref<16x64xbf16, #tpu.memory_space<vmem>>, %arg3: memref<1x64xbf16, #tpu.memory_space<vmem>>, %arg4: memref<64x32xbf16, #tpu.memory_space<vmem>>, %arg5: memref<1x32xf32, #tpu.memory_space<vmem>>, %arg6: memref<1x32xf32, #tpu.memory_space<vmem>>, %arg7: memref<1x1xf32, #tpu.memory_space<vmem>>, %arg8: memref<1x1x128xf32, #tpu.memory_space<vmem>>) attributes {dimension_semantics = [#tpu.dimension_semantics<parallel>], iteration_bounds = array<i64: 1>, scalar_prefetch = 0 : i64, scratch_operands = 0 : i64, tpu.core_type = #tpu.core_type<tc>, window_params = [{transform_indices = @transform_0, window_bounds = array<i64: 128, 16>}, {pipeline_mode = #tpu.pipeline_mode<synchronous>, transform_indices = @transform_1, window_bounds = array<i64: 16, 64>}, {pipeline_mode = #tpu.pipeline_mode<synchronous>, transform_indices = @transform_2, window_bounds = array<i64: 1, 64>}, {pipeline_mode = #tpu.pipeline_mode<synchronous>, transform_indices = @transform_3, window_bounds = array<i64: 64, 32>}, {pipeline_mode = #tpu.pipeline_mode<synchronous>, transform_indices = @transform_4, window_bounds = array<i64: 1, 32>}, {pipeline_mode = #tpu.pipeline_mode<synchronous>, transform_indices = @transform_5, window_bounds = array<i64: 1, 32>}, {pipeline_mode = #tpu.pipeline_mode<synchronous>, transform_indices = @transform_6, window_bounds = array<i64: 1, 1>}, {transform_indices = @transform_7, window_bounds = array<i64: 1, 1, 128>}]} {
    %c0 = arith.constant 0 : index
    %c0_0 = arith.constant 0 : index
    %0 = vector.load %arg1[%c0, %c0_0] : memref<128x16xf32, #tpu.memory_space<vmem>>, vector<128x16xf32>
    %1 = arith.truncf %0 : vector<128x16xf32> to vector<128x16xbf16>
    %c0_1 = arith.constant 0 : index
    %c0_2 = arith.constant 0 : index
    %2 = vector.load %arg2[%c0_1, %c0_2] : memref<16x64xbf16, #tpu.memory_space<vmem>>, vector<16x64xbf16>
    %cst = arith.constant dense<0.000000e+00> : vector<128x64xf32>
    %3 = tpu.matmul %1, %2, %cst {dimension_numbers = #tpu.dot_dimension_numbers<[1], [0], [0], [1], [0, 0, 1, 1], [], []>} : vector<128x16xbf16>, vector<16x64xbf16>, vector<128x64xf32> -> vector<128x64xf32>
    %4 = arith.truncf %3 : vector<128x64xf32> to vector<128x64xbf16>
    %c0_3 = arith.constant 0 : index
    %c0_4 = arith.constant 0 : index
    %5 = vector.load %arg3[%c0_3, %c0_4] : memref<1x64xbf16, #tpu.memory_space<vmem>>, vector<1x64xbf16>
    %6 = vector.broadcast %5 : vector<1x64xbf16> to vector<128x64xbf16>
    %7 = arith.addf %4, %6 : vector<128x64xbf16>
    %cst_5 = arith.constant 0.000000e+00 : bf16
    %8 = vector.broadcast %cst_5 : bf16 to vector<128x64xbf16>
    %9 = arith.maximumf %7, %8 : vector<128x64xbf16>
    %c0_6 = arith.constant 0 : index
    %c0_7 = arith.constant 0 : index
    %10 = vector.load %arg4[%c0_6, %c0_7] : memref<64x32xbf16, #tpu.memory_space<vmem>>, vector<64x32xbf16>
    %cst_8 = arith.constant dense<0.000000e+00> : vector<128x32xf32>
    %11 = tpu.matmul %9, %10, %cst_8 {dimension_numbers = #tpu.dot_dimension_numbers<[1], [0], [0], [1], [0, 0, 1, 1], [], []>} : vector<128x64xbf16>, vector<64x32xbf16>, vector<128x32xf32> -> vector<128x32xf32>
    %c0_9 = arith.constant 0 : index
    %c0_10 = arith.constant 0 : index
    %12 = vector.load %arg5[%c0_9, %c0_10] : memref<1x32xf32, #tpu.memory_space<vmem>>, vector<1x32xf32>
    %13 = vector.broadcast %12 : vector<1x32xf32> to vector<128x32xf32>
    %14 = arith.addf %11, %13 : vector<128x32xf32>
    %cst_11 = arith.constant 0.000000e+00 : f32
    %15 = vector.broadcast %cst_11 : f32 to vector<128x32xf32>
    %16 = arith.maximumf %14, %15 : vector<128x32xf32>
    %c0_12 = arith.constant 0 : index
    %c0_13 = arith.constant 0 : index
    %17 = vector.load %arg6[%c0_12, %c0_13] : memref<1x32xf32, #tpu.memory_space<vmem>>, vector<1x32xf32>
    %18 = tpu.transpose %16, [1, 0] : vector<128x32xf32> -> vector<32x128xf32>
    %cst_14 = arith.constant dense<0.000000e+00> : vector<1x128xf32>
    %19 = tpu.matmul %17, %18, %cst_14 {dimension_numbers = #tpu.dot_dimension_numbers<[1], [0], [0], [1], [0, 0, 1, 1], [], []>} : vector<1x32xf32>, vector<32x128xf32>, vector<1x128xf32> -> vector<1x128xf32>
    %c0_15 = arith.constant 0 : index
    %c0_16 = arith.constant 0 : index
    %20 = vector.load %arg7[%c0_15, %c0_16] : memref<1x1xf32, #tpu.memory_space<vmem>>, vector<1x1xf32>
    %21 = vector.broadcast %20 : vector<1x1xf32> to vector<1x128xf32>
    %22 = arith.addf %19, %21 : vector<1x128xf32>
    %23 = vector.shape_cast %22 : vector<1x128xf32> to vector<1x1x128xf32>
    %c0_17 = arith.constant 0 : index
    %c0_18 = arith.constant 0 : index
    %c0_19 = arith.constant 0 : index
    %24 = vector.load %arg8[%c0_17, %c0_18, %c0_19] : memref<1x1x128xf32, #tpu.memory_space<vmem>>, vector<1x1x128xf32>
    tpu.vector_store %arg8[%c0_17, %c0_18, %c0_19], %23 {strides = array<i32>} : memref<1x1x128xf32, #tpu.memory_space<vmem>>, vector<1x1x128xf32>,
    return
  }
  func.func @transform_0(%arg0: i32) -> (i32, i32) {
    %c0_i32 = arith.constant 0 : i32
    %c0_i32_0 = arith.constant 0 : i32
    return %arg0, %c0_i32 : i32, i32
  }
  func.func @transform_1(%arg0: i32) -> (i32, i32) {
    %c0_i32 = arith.constant 0 : i32
    %c0_i32_0 = arith.constant 0 : i32
    %c0_i32_1 = arith.constant 0 : i32
    return %c0_i32, %c0_i32_0 : i32, i32
  }
  func.func @transform_2(%arg0: i32) -> (i32, i32) {
    %c0_i32 = arith.constant 0 : i32
    %c0_i32_0 = arith.constant 0 : i32
    %c0_i32_1 = arith.constant 0 : i32
    return %c0_i32, %c0_i32_0 : i32, i32
  }
  func.func @transform_3(%arg0: i32) -> (i32, i32) {
    %c0_i32 = arith.constant 0 : i32
    %c0_i32_0 = arith.constant 0 : i32
    %c0_i32_1 = arith.constant 0 : i32
    return %c0_i32, %c0_i32_0 : i32, i32
  }
  func.func @transform_4(%arg0: i32) -> (i32, i32) {
    %c0_i32 = arith.constant 0 : i32
    %c0_i32_0 = arith.constant 0 : i32
    %c0_i32_1 = arith.constant 0 : i32
    return %c0_i32, %c0_i32_0 : i32, i32
  }
  func.func @transform_5(%arg0: i32) -> (i32, i32) {
    %c0_i32 = arith.constant 0 : i32
    %c0_i32_0 = arith.constant 0 : i32
    %c0_i32_1 = arith.constant 0 : i32
    return %c0_i32, %c0_i32_0 : i32, i32
  }
  func.func @transform_6(%arg0: i32) -> (i32, i32) {
    %c0_i32 = arith.constant 0 : i32
    %c0_i32_0 = arith.constant 0 : i32
    %c0_i32_1 = arith.constant 0 : i32
    return %c0_i32, %c0_i32_0 : i32, i32
  }
  func.func @transform_7(%arg0: i32) -> (i32, i32, i32) {
    %c0_i32 = arith.constant 0 : i32
    %c0_i32_0 = arith.constant 0 : i32
    %c0_i32_1 = arith.constant 0 : i32
    return %arg0, %c0_i32, %c0_i32_0 : i32, i32, i32
  }
}

</mosaic_0001>

<llo_original>
// kernel: tpu_custom_call.1
$region0: #{tpu_custom_call.1}
  #allocation0 [shape = 'u32[]', space=smem, size = 0x4, offset = 0x4, fixed_abs, tag = 'smem constant byte address 0x4 - core index']
  #allocation1 [shape = 'u32[72,128]{1,0:T(1,128)}', space=vmem, size = 0x9000, scoped, tag = 'internal scratch']
  #allocation2 [shape = 'f32[1,1]{1,0:T(1,128)S(1)}', space=vmem, size = 0x200, scoped, tag = 'scoped memory for tpu_custom_call.1']
  %s0 = inlined_call_operand.vmem [shape: f32[100,16], index: 0, kind: input, shape index: {}]
  %s1 = inlined_call_operand.vmem [shape: bf16[16,64], index: 1, kind: input, shape index: {}]
  %s2 = inlined_call_operand.vmem [shape: bf16[1,64], index: 2, kind: input, shape index: {}]
  %s3 = inlined_call_operand.vmem [shape: bf16[64,32], index: 3, kind: input, shape index: {}]
  %s4 = inlined_call_operand.vmem [shape: f32[1,32], index: 4, kind: input, shape index: {}]
  %s5 = inlined_call_operand.vmem [shape: f32[1,32], index: 5, kind: input, shape index: {}]
  %s6 = inlined_call_operand.<no memory space> [shape: f32[1,1], index: 6, kind: input, shape index: {}]
  %s7 = inlined_call_operand.hbm [shape: f32[1,1,128], index: 7, kind: output, shape index: {}]
  %s8 = sld [smem:[#allocation0]]
  $region38: #{tpu_custom_call.1} parent=0
    _
  %s10 = ssub.s32 1, %s8
  %s11 = scalar_select 0, %s10, %s8
  %v12 = vstv %s6
  %13 = vst [vmem:[#allocation2] sm:$0x1] %v12
  $region1: #{tpu_custom_call.1} parent=0
    #allocation3 [shape = 'u8[512]{0}', space=vmem, size = 0x400, scoped, tag = 'output window, operand 0, single buffered']
    #allocation4 [shape = 's32[1]{0}', space=sflag, size = 0x4, scoped, tag = 'scoped memory for tpu_custom_call.1']
    %14 = vsyncpa [#allocation4], 0
    // Predicated region
    $region2: #{tpu_custom_call.1} parent=1 // pred_check
      _
    $region3: #{tpu_custom_call.1} parent=1 // pred_check_branch
      %16 = sbr.rel (0) target = $region5
    $region4: #{tpu_custom_call.1} parent=1 // pred_region
      _
    $region5: #{tpu_custom_call.1} parent=1 // pred_fallthru
      _
    // Predicated region
    $region6: #{tpu_custom_call.1} parent=1 // pred_check
      _
    $region7: #{tpu_custom_call.1} parent=1 // pred_check_branch
      %18 = sbr.rel (0) target = $region9
    $region8: #{tpu_custom_call.1} parent=1 // pred_region
      _
    $region9: #{tpu_custom_call.1} parent=1 // pred_fallthru
      _
    // Predicated region
    $region10: #{tpu_custom_call.1} parent=1 // pred_check
      _
    $region11: #{tpu_custom_call.1} parent=1 // pred_check_branch
      %20 = sbr.rel (0) target = $region13
    $region12: #{tpu_custom_call.1} parent=1 // pred_region
      _
    $region13: #{tpu_custom_call.1} parent=1 // pred_fallthru
      _
    // Predicated region
    $region14: #{tpu_custom_call.1} parent=1 // pred_check
      _
    $region15: #{tpu_custom_call.1} parent=1 // pred_check_branch
      %22 = sbr.rel (0) target = $region17
    $region16: #{tpu_custom_call.1} parent=1 // pred_region
      _
    $region17: #{tpu_custom_call.1} parent=1 // pred_fallthru
      _
    // Predicated region
    $region18: #{tpu_custom_call.1} parent=1 // pred_check
      _
    $region19: #{tpu_custom_call.1} parent=1 // pred_check_branch
      %24 = sbr.rel (0) target = $region21
    $region20: #{tpu_custom_call.1} parent=1 // pred_region
      _
    $region21: #{tpu_custom_call.1} parent=1 // pred_fallthru
      _
    // Predicated region
    $region22: #{tpu_custom_call.1} parent=1 // pred_check
      _
    $region23: #{tpu_custom_call.1} parent=1 // pred_check_branch
      %26 = sbr.rel (0) target = $region25
    $region24: #{tpu_custom_call.1} parent=1 // pred_region
      _
    $region25: #{tpu_custom_call.1} parent=1 // pred_fallthru
      _
    // Predicated region
    $region26: #{tpu_custom_call.1} parent=1 // pred_check
      _
    $region27: #{tpu_custom_call.1} parent=1 // pred_check_branch
      %28 = sbr.rel (0) target = $region29
    $region28: #{tpu_custom_call.1} parent=1 // pred_region
      _
    $region29: #{tpu_custom_call.1} parent=1 // pred_fallthru
      _
    %v30 = vld [vmem:[%s0] sm:$0xff]
    %v31 = vld [vmem:[%s0 + $0x8] sm:$0xff]
    %v32 = vld [vmem:[%s0 + $0x10] sm:$0xff]
    %v33 = vld [vmem:[%s0 + $0x18] sm:$0xff]
    %v34 = vld [vmem:[%s0 + $0x20] sm:$0xff]
    %v35 = vld [vmem:[%s0 + $0x28] sm:$0xff]
    %v36 = vld [vmem:[%s0 + $0x30] sm:$0xff]
    %v37 = vld [vmem:[%s0 + $0x38] sm:$0xff]
    %v38 = vld [vmem:[%s0 + $0x40] sm:$0xff]
    %v39 = vld [vmem:[%s0 + $0x48] sm:$0xff]
    %v40 = vld [vmem:[%s0 + $0x50] sm:$0xff]
    %v41 = vld [vmem:[%s0 + $0x58] sm:$0xff]
    %v42 = vld [vmem:[%s0 + $0x60] sm:$0xff]
    %v43 = vld [vmem:[%s0 + $0x68] sm:$0xff]
    %v44 = vld [vmem:[%s0 + $0x70] sm:$0xff]
    %v45 = vld [vmem:[%s0 + $0x78] sm:$0xff]
    %v46 = vpack.c.bf16 %v31, %v30
    %v47 = vpack.c.bf16 %v33, %v32
    %v48 = vpack.c.bf16 %v35, %v34
    %v49 = vpack.c.bf16 %v37, %v36
    %v50 = vpack.c.bf16 %v39, %v38
    %v51 = vpack.c.bf16 %v41, %v40
    %v52 = vpack.c.bf16 %v43, %v42
    %v53 = vpack.c.bf16 %v45, %v44
    %v54 = vld [vmem:[%s1] sm:$0xf]
    %v55 = vld [vmem:[%s1 + $0x4] sm:$0xf]
    %v58 = vunpack.c.l.b16 %v54
    %v59 = vunpack.c.l.b16 %v55
    %v60 = vpack.c.b16 %v59, %v58
    %vm62 = vcmask 130048
    %v64 = vsel %vm62, %v46, 0
    %v67 = vsel %vm62, %v47, 0
    %v70 = vsel %vm62, %v48, 0
    %v73 = vsel %vm62, %v49, 0
    %v76 = vsel %vm62, %v50, 0
    %v79 = vsel %vm62, %v51, 0
    %v82 = vsel %vm62, %v52, 0
    %v85 = vsel %vm62, %v53, 0
    %87 = vmatpush.bf16.msra.mxu0 0
    %88 = vmatpush.bf16.msra.mxu0 0
    %89 = vmatpush.bf16.msra.mxu0 0
    %90 = vmatpush.bf16.msra.mxu0 0
    %91 = vmatpush.bf16.msra.mxu0 0
    %92 = vmatpush.bf16.msra.mxu0 0
    %93 = vmatpush.bf16.msra.mxu0 0
    %94 = vmatpush.bf16.msra.mxu0 %v60
    %95 = vmatmul.bf16.gmra.mxu0 %v64
    %v96 = vpop.f32.mrf.mxu0
    %v97 = vadd.f32 0.0, %v96
    %v98 = vpop.f32.mrf.mxu0
    %v99 = vadd.f32 0.0, %v98
    %100 = vmatmul.bf16.gmra.mxu0 %v67
    %v101 = vpop.f32.mrf.mxu0
    %v102 = vadd.f32 0.0, %v101
    %v103 = vpop.f32.mrf.mxu0
    %v104 = vadd.f32 0.0, %v103
    %105 = vmatmul.bf16.gmra.mxu0 %v70
    %v106 = vpop.f32.mrf.mxu0
    %v107 = vadd.f32 0.0, %v106
    %v108 = vpop.f32.mrf.mxu0
    %v109 = vadd.f32 0.0, %v108
    %110 = vmatmul.bf16.gmra.mxu0 %v73
    %v111 = vpop.f32.mrf.mxu0
    %v112 = vadd.f32 0.0, %v111
    %v113 = vpop.f32.mrf.mxu0
    %v114 = vadd.f32 0.0, %v113
    %115 = vmatmul.bf16.gmra.mxu0 %v76
    %v116 = vpop.f32.mrf.mxu0
    %v117 = vadd.f32 0.0, %v116
    %v118 = vpop.f32.mrf.mxu0
    %v119 = vadd.f32 0.0, %v118
    %120 = vmatmul.bf16.gmra.mxu0 %v79
    %v121 = vpop.f32.mrf.mxu0
    %v122 = vadd.f32 0.0, %v121
    %v123 = vpop.f32.mrf.mxu0
    %v124 = vadd.f32 0.0, %v123
    %125 = vmatmul.bf16.gmra.mxu0 %v82
    %v126 = vpop.f32.mrf.mxu0
    %v127 = vadd.f32 0.0, %v126
    %v128 = vpop.f32.mrf.mxu0
    %v129 = vadd.f32 0.0, %v128
    %130 = vmatmul.bf16.gmra.mxu0 %v85
    %v131 = vpop.f32.mrf.mxu0
    %v132 = vadd.f32 0.0, %v131
    %v133 = vpop.f32.mrf.mxu0
    %v134 = vadd.f32 0.0, %v133
    %135 = vdwg.mxu0
    %v136 = vpack.c.bf16 %v97, %v97
    %v137 = vpack.c.bf16 %v99, %v99
    %v138 = vpack.c.bf16 %v102, %v102
    %v139 = vpack.c.bf16 %v104, %v104
    %v140 = vpack.c.bf16 %v107, %v107
    %v141 = vpack.c.bf16 %v109, %v109
    %v142 = vpack.c.bf16 %v112, %v112
    %v143 = vpack.c.bf16 %v114, %v114
    %v144 = vpack.c.bf16 %v117, %v117
    %v145 = vpack.c.bf16 %v119, %v119
    %v146 = vpack.c.bf16 %v122, %v122
    %v147 = vpack.c.bf16 %v124, %v124
    %v148 = vpack.c.bf16 %v127, %v127
    %v149 = vpack.c.bf16 %v129, %v129
    %v150 = vpack.c.bf16 %v132, %v132
    %v151 = vpack.c.bf16 %v134, %v134
    %v152 = vld [vmem:[%s2] sm:$0x1]
    %v154 = vpack.i.b16 %v152, %v152
    %v156 = vperm.slane %v154, 0
    %v157 = vunpack.c.l.bf16 %v136
    %v158 = vunpack.c.l.bf16 %v137
    %v159 = vunpack.c.l.bf16 %v138
    %v160 = vunpack.c.l.bf16 %v139
    %v161 = vunpack.c.l.bf16 %v140
    %v162 = vunpack.c.l.bf16 %v141
    %v163 = vunpack.c.l.bf16 %v142
    %v164 = vunpack.c.l.bf16 %v143
    %v165 = vunpack.c.l.bf16 %v144
    %v166 = vunpack.c.l.bf16 %v145
    %v167 = vunpack.c.l.bf16 %v146
    %v168 = vunpack.c.l.bf16 %v147
    %v169 = vunpack.c.l.bf16 %v148
    %v170 = vunpack.c.l.bf16 %v149
    %v171 = vunpack.c.l.bf16 %v150
    %v172 = vunpack.c.l.bf16 %v151
    %v173 = vunpack.c.l.bf16 %v156
    %v174 = vadd.f32 %v157, %v173
    %v175 = vadd.f32 %v158, %v173
    %v176 = vadd.f32 %v159, %v173
    %v177 = vadd.f32 %v160, %v173
    %v178 = vadd.f32 %v161, %v173
    %v179 = vadd.f32 %v162, %v173
    %v180 = vadd.f32 %v163, %v173
    %v181 = vadd.f32 %v164, %v173
    %v182 = vadd.f32 %v165, %v173
    %v183 = vadd.f32 %v166, %v173
    %v184 = vadd.f32 %v167, %v173
    %v185 = vadd.f32 %v168, %v173
    %v186 = vadd.f32 %v169, %v173
    %v187 = vadd.f32 %v170, %v173
    %v188 = vadd.f32 %v171, %v173
    %v189 = vadd.f32 %v172, %v173
    %v190 = vpack.c.bf16 %v174, %v174
    %v191 = vpack.c.bf16 %v175, %v175
    %v192 = vpack.c.bf16 %v176, %v176
    %v193 = vpack.c.bf16 %v177, %v177
    %v194 = vpack.c.bf16 %v178, %v178
    %v195 = vpack.c.bf16 %v179, %v179
    %v196 = vpack.c.bf16 %v180, %v180
    %v197 = vpack.c.bf16 %v181, %v181
    %v198 = vpack.c.bf16 %v182, %v182
    %v199 = vpack.c.bf16 %v183, %v183
    %v200 = vpack.c.bf16 %v184, %v184
    %v201 = vpack.c.bf16 %v185, %v185
    %v202 = vpack.c.bf16 %v186, %v186
    %v203 = vpack.c.bf16 %v187, %v187
    %v204 = vpack.c.bf16 %v188, %v188
    %v205 = vpack.c.bf16 %v189, %v189
    %v206 = vunpack.c.l.bf16 %v190
    %v207 = vunpack.c.l.bf16 %v191
    %v208 = vunpack.c.l.bf16 %v192
    %v209 = vunpack.c.l.bf16 %v193
    %v210 = vunpack.c.l.bf16 %v194
    %v211 = vunpack.c.l.bf16 %v195
    %v212 = vunpack.c.l.bf16 %v196
    %v213 = vunpack.c.l.bf16 %v197
    %v214 = vunpack.c.l.bf16 %v198
    %v215 = vunpack.c.l.bf16 %v199
    %v216 = vunpack.c.l.bf16 %v200
    %v217 = vunpack.c.l.bf16 %v201
    %v218 = vunpack.c.l.bf16 %v202
    %v219 = vunpack.c.l.bf16 %v203
    %v220 = vunpack.c.l.bf16 %v204
    %v221 = vunpack.c.l.bf16 %v205
    %v222 = vmax.f32 %v206, 0.0
    %v223 = vmax.f32 %v207, 0.0
    %v224 = vmax.f32 %v208, 0.0
    %v225 = vmax.f32 %v209, 0.0
    %v226 = vmax.f32 %v210, 0.0
    %v227 = vmax.f32 %v211, 0.0
    %v228 = vmax.f32 %v212, 0.0
    %v229 = vmax.f32 %v213, 0.0
    %v230 = vmax.f32 %v214, 0.0
    %v231 = vmax.f32 %v215, 0.0
    %v232 = vmax.f32 %v216, 0.0
    %v233 = vmax.f32 %v217, 0.0
    %v234 = vmax.f32 %v218, 0.0
    %v235 = vmax.f32 %v219, 0.0
    %v236 = vmax.f32 %v220, 0.0
    %v237 = vmax.f32 %v221, 0.0
    %v238 = vpack.c.bf16 %v223, %v222
    %v239 = vpack.c.bf16 %v225, %v224
    %v240 = vpack.c.bf16 %v227, %v226
    %v241 = vpack.c.bf16 %v229, %v228
    %v242 = vpack.c.bf16 %v231, %v230
    %v243 = vpack.c.bf16 %v233, %v232
    %v244 = vpack.c.bf16 %v235, %v234
    %v245 = vpack.c.bf16 %v237, %v236
    %v246 = vld [vmem:[%s3] sm:$0xf]
    %v247 = vld [vmem:[%s3 + $0x4] sm:$0xf]
    %v248 = vld [vmem:[%s3 + $0x8] sm:$0xf]
    %v249 = vld [vmem:[%s3 + $0xc] sm:$0xf]
    %v250 = vld [vmem:[%s3 + $0x10] sm:$0xf]
    %v251 = vld [vmem:[%s3 + $0x14] sm:$0xf]
    %v252 = vld [vmem:[%s3 + $0x18] sm:$0xf]
    %v253 = vld [vmem:[%s3 + $0x1c] sm:$0xf]
    %v254 = vld [vmem:[%s4] sm:$0x1]
    %v256 = vperm.slane %v254, 0
    %v266 = vunpack.c.l.b16 %v246
    %v267 = vunpack.c.l.b16 %v247
    %v268 = vunpack.c.l.b16 %v248
    %v269 = vunpack.c.l.b16 %v249
    %v270 = vunpack.c.l.b16 %v250
    %v271 = vunpack.c.l.b16 %v251
    %v272 = vunpack.c.l.b16 %v252
    %v273 = vunpack.c.l.b16 %v253
    %v274 = vpack.c.b16 %v267, %v266
    %v275 = vpack.c.b16 %v269, %v268
    %v276 = vpack.c.b16 %v271, %v270
    %v277 = vpack.c.b16 %v273, %v272
    %vm282 = vcmask 523264
    %v284 = vsel %vm282, %v238, 0
    %v287 = vsel %vm282, %v239, 0
    %v290 = vsel %vm282, %v240, 0
    %v293 = vsel %vm282, %v241, 0
    %v296 = vsel %vm282, %v242, 0
    %v299 = vsel %vm282, %v243, 0
    %v302 = vsel %vm282, %v244, 0
    %v305 = vsel %vm282, %v245, 0
    %307 = vmatpush.bf16.msra.mxu0 0
    %308 = vmatpush.bf16.msra.mxu0 0
    %309 = vmatpush.bf16.msra.mxu0 0
    %310 = vmatpush.bf16.msra.mxu0 0
    %311 = vmatpush.bf16.msra.mxu0 %v277
    %312 = vmatpush.bf16.msra.mxu0 %v276
    %313 = vmatpush.bf16.msra.mxu0 %v275
    %314 = vmatpush.bf16.msra.mxu0 %v274
    %315 = vmatmul.bf16.gmra.mxu0 %v284
    %v316 = vpop.f32.mrf.mxu0
    %v317 = vadd.f32 %v256, %v316
    %v318 = vpop.f32.mrf.mxu0
    %v319 = vadd.f32 %v256, %v318
    %320 = vmatmul.bf16.gmra.mxu0 %v287
    %v321 = vpop.f32.mrf.mxu0
    %v322 = vadd.f32 %v256, %v321
    %v323 = vpop.f32.mrf.mxu0
    %v324 = vadd.f32 %v256, %v323
    %325 = vmatmul.bf16.gmra.mxu0 %v290
    %v326 = vpop.f32.mrf.mxu0
    %v327 = vadd.f32 %v256, %v326
    %v328 = vpop.f32.mrf.mxu0
    %v329 = vadd.f32 %v256, %v328
    %330 = vmatmul.bf16.gmra.mxu0 %v293
    %v331 = vpop.f32.mrf.mxu0
    %v332 = vadd.f32 %v256, %v331
    %v333 = vpop.f32.mrf.mxu0
    %v334 = vadd.f32 %v256, %v333
    %335 = vmatmul.bf16.gmra.mxu0 %v296
    %v336 = vpop.f32.mrf.mxu0
    %v337 = vadd.f32 %v256, %v336
    %v338 = vpop.f32.mrf.mxu0
    %v339 = vadd.f32 %v256, %v338
    %340 = vmatmul.bf16.gmra.mxu0 %v299
    %v341 = vpop.f32.mrf.mxu0
    %v342 = vadd.f32 %v256, %v341
    %v343 = vpop.f32.mrf.mxu0
    %v344 = vadd.f32 %v256, %v343
    %345 = vmatmul.bf16.gmra.mxu0 %v302
    %v346 = vpop.f32.mrf.mxu0
    %v347 = vadd.f32 %v256, %v346
    %v348 = vpop.f32.mrf.mxu0
    %v349 = vadd.f32 %v256, %v348
    %350 = vmatmul.bf16.gmra.mxu0 %v305
    %v351 = vpop.f32.mrf.mxu0
    %v352 = vadd.f32 %v256, %v351
    %v353 = vpop.f32.mrf.mxu0
    %v354 = vadd.f32 %v256, %v353
    %355 = vdwg.mxu0
    %v356 = vmax.f32 %v317, 0.0
    %v357 = vmax.f32 %v319, 0.0
    %v358 = vmax.f32 %v322, 0.0
    %v359 = vmax.f32 %v324, 0.0
    %v360 = vmax.f32 %v327, 0.0
    %v361 = vmax.f32 %v329, 0.0
    %v362 = vmax.f32 %v332, 0.0
    %v363 = vmax.f32 %v334, 0.0
    %v364 = vmax.f32 %v337, 0.0
    %v365 = vmax.f32 %v339, 0.0
    %v366 = vmax.f32 %v342, 0.0
    %v367 = vmax.f32 %v344, 0.0
    %v368 = vmax.f32 %v347, 0.0
    %v369 = vmax.f32 %v349, 0.0
    %v370 = vmax.f32 %v352, 0.0
    %v371 = vmax.f32 %v354, 0.0
    %v372 = vld [vmem:[%s5] sm:$0x1]
    %v373 = vld [vmem:[#allocation2] sm:$0x1]
    %375 = vset.pattern.permute.xlu0 0
    %376 = vperm.xlu0 %375, %v373
    %v377 = vpop.permute.xlu0 %376
    %v379 = vperm.slane %v377, 0
    %vm380 = vcmask 261120
    %v382 = vsel %vm380, %v372, 0
    %v385 = vsel %vm380, %v356, 0
    %v388 = vsel %vm380, %v357, 0
    %v391 = vsel %vm380, %v358, 0
    %v394 = vsel %vm380, %v359, 0
    %v397 = vsel %vm380, %v360, 0
    %v400 = vsel %vm380, %v361, 0
    %v403 = vsel %vm380, %v362, 0
    %v406 = vsel %vm380, %v363, 0
    %v409 = vsel %vm380, %v364, 0
    %v412 = vsel %vm380, %v365, 0
    %v415 = vsel %vm380, %v366, 0
    %v418 = vsel %vm380, %v367, 0
    %v421 = vsel %vm380, %v368, 0
    %v424 = vsel %vm380, %v369, 0
    %v427 = vsel %vm380, %v370, 0
    %v430 = vsel %vm380, %v371, 0
    %432 = vmatpush.xpose.msra.mxu0 %v430
    %433 = vmatpush.xpose.msra.mxu0 %v427
    %434 = vmatpush.xpose.msra.mxu0 %v424
    %435 = vmatpush.xpose.msra.mxu0 %v421
    %436 = vmatpush.xpose.msra.mxu0 %v418
    %437 = vmatpush.xpose.msra.mxu0 %v415
    %438 = vmatpush.xpose.msra.mxu0 %v412
    %439 = vmatpush.xpose.msra.mxu0 %v409
    %440 = vmatpush.xpose.msra.mxu0 %v406
    %441 = vmatpush.xpose.msra.mxu0 %v403
    %442 = vmatpush.xpose.msra.mxu0 %v400
    %443 = vmatpush.xpose.msra.mxu0 %v397
    %444 = vmatpush.xpose.msra.mxu0 %v394
    %445 = vmatpush.xpose.msra.mxu0 %v391
    %446 = vmatpush.xpose.msra.mxu0 %v388
    %447 = vmatpush.xpose.msra.mxu0 %v385
    %448 = vmatmul.f32.gmra.mxu0 %v382
    %v449 = vpop.f32.mrf.mxu0
    %v450 = vadd.f32 %v379, %v449
    %451 = vdwg.mxu0
    %452 = vst [vmem:[#allocation3] sm:$0x1] %v450
    // Predicated region
    $region30: #{tpu_custom_call.1} parent=1 // pred_check
      _
    $region31: #{tpu_custom_call.1} parent=1 // pred_check_branch
      %454 = sbr.rel (0) target = $region33
    $region32: #{tpu_custom_call.1} parent=1 // pred_region
      %456 = vsyncadd [#allocation4], 0
      %s458 = sshll.u32 [#allocation3], 4
      %s459 = int_to_ptr.vmem [resolvable:$true] %s458
      %s460 = sshll.u32 %s7, 4
      %s461 = int_to_ptr.hbm [resolvable:$true] %s460
      %463 = dma.vmem_to_hbm [thread:$0]  %s459, 16, %s461, [#allocation4]
    $region33: #{tpu_custom_call.1} parent=1 // pred_fallthru
      _
    // Predicated region
    $region34: #{tpu_custom_call.1} parent=1 // pred_check
      _
    $region35: #{tpu_custom_call.1} parent=1 // pred_check_branch
      %465 = sbr.rel (0) target = $region37
    $region36: #{tpu_custom_call.1} parent=1 // pred_region
      %467 = dma.done [#allocation4], 16
    $region37: #{tpu_custom_call.1} parent=1 // pred_fallthru
      _
    %468 = vsyncpa [#allocation4], 1

</llo_original>
